<compile_context>
chip_gen: v7x
topology: tpu7x:2x2x1
jax: 0.10.0
libtpu: 0.0.40
codegen_flags: <defaults>
</compile_context>

<pallas_src>
import functools

import jax
import jax.numpy as jnp
import numpy as np
from jax import lax
from jax.experimental import pallas as pl
from jax.experimental.pallas import tpu as pltpu


def _round_up(x, m):
    return (x + m - 1) // m * m


def _sublane_tile(dtype):
    # Minimum second-to-last tile: f32 -> 8, bf16 -> 16, int8/fp8 -> 32.
    return max(8, 32 // max(1, jnp.dtype(dtype).itemsize))


def _pcmn_kernel(xpad_ref, w_ref, bias_ref, o_ref, *,
                 kernel_size, center_tap, chunk_w, compute_dtype):
    """One row-block per grid step, register-blocked over lane chunks.

    xpad_ref : (R, W_out + 128)  replicate-padded input rows (128-lane halo)
    w_ref    : (3, R, K)         stacked depthwise weights [beta, alpha, mu_n_0]
    bias_ref : (R, 1)            shared conv bias (per row)
    o_ref    : (R, W_out)        output (tail lanes beyond T sliced off by caller)
    """
    R, W_out = o_ref.shape
    slab_w = chunk_w + 128                       # chunk + halo (K - 1 <= 128)
    n_chunks = pl.cdiv(W_out, chunk_w)           # static python int

    w = w_ref[...].astype(compute_dtype)         # (3, R, K) -- hoisted, one load
    bias = bias_ref[...].astype(jnp.float32)     # (R, 1)

    # Loop-invariant per-tap weight columns; lane broadcast happens in the FMA.
    wb = [w[0, :, k:k + 1] for k in range(kernel_size)]
    wa = [w[1, :, k:k + 1] for k in range(kernel_size)]
    wm = [w[2, :, k:k + 1] for k in range(kernel_size)]

    # Fold the conv bias (and beta's +1) into the accumulator init.
    beta_init = jnp.broadcast_to(bias + 1.0, (R, chunk_w))
    bias_init = jnp.broadcast_to(bias, (R, chunk_w))

    def chunk_body(c, carry):
        # Clamp the last chunk so it overlaps the previous one instead of
        # running past W_out (stores are idempotent); start stays 128-aligned.
        start = pl.multiple_of(jnp.minimum(c * chunk_w, W_out - chunk_w), 128)
        slab = xpad_ref[:, pl.ds(start, slab_w)].astype(compute_dtype)  # (R, slab_w)

        acc_b = beta_init
        acc_a = bias_init
        acc_m = bias_init
        x_center = slab[:, :chunk_w]

        # Depthwise (groups == D) 1-D conv over time, unrolled over K taps.
        for k in range(kernel_size):
            # cur[:, t] == slab[:, t + k] for t < chunk_w (k <= 128 => no wrap
            # contamination inside the first chunk_w lanes).
            cur = slab if k == 0 else pltpu.roll(slab, shift=slab_w - k, axis=1)
            cur = cur[:, :chunk_w]
            if k == center_tap:
                x_center = cur                   # == the un-padded input frames
            acc_b = acc_b + wb[k] * cur
            acc_a = acc_a + wa[k] * cur
            acc_m = acc_m + wm[k] * cur

        out = acc_b * x_center.astype(jnp.float32) - acc_a * acc_m
        o_ref[:, pl.ds(start, chunk_w)] = out.astype(o_ref.dtype)
        return carry

    lax.fori_loop(0, n_chunks, chunk_body, 0)


def adaptive_pcmn(x, beta_w, alpha_w, mu_n_0_w, bias, *,
                  left_context=-10, right_context=10, pad=True,
                  row_block=None, chunk_w=None, compute_dtype=jnp.float32):
    """Pallas implementation of AdaptivePCMN.forward.

    x        : (B, D, T)  float32
    beta_w   : (D, 1, K)  K = right_context - left_context + 1
    alpha_w  : (D, 1, K)
    mu_n_0_w : (D, 1, K)
    bias     : (D,)
    returns  : (B, D, T) if pad else (B, D, T - K + 1)
    """
    assert x.ndim == 3
    B, D, T = x.shape
    K = right_context - left_context + 1
    Lc, Rc = -left_context, right_context
    assert Lc > 0 and Rc > 0 and T >= K
    # TODO(synk): contexts wider than 129 taps need a >128-lane halo path.
    assert K - 1 <= 128, "tot_context - 1 must fit in a 128-lane halo"

    rows = B * D
    T_out = T if pad else T - K + 1
    lead = Lc if pad else 0

    itemsize = jnp.dtype(x.dtype).itemsize
    sub = _sublane_tile(x.dtype)

    # Lane-dense output width (multiple of 128); input carries a 128-lane halo.
    W_out = _round_up(T_out, 128)
    W_in = W_out + 128

    # Row block: ~1 MiB input blocks, but keep >= 4 grid steps when the row
    # count allows it (so the "parallel" axis shards across v7x's 2 TCs).
    rows_r = _round_up(rows, sub)
    if row_block is None:
        tgt = max(sub, ((1 << 20) // (W_in * itemsize)) // sub * sub)
        cap = max(sub, (rows_r // 4) // sub * sub)
        row_block = min(tgt, rows_r, cap)
    row_block = max(sub, (row_block // sub) * sub)
    R_pad = _round_up(rows, row_block)

    # Chunk width: each (row_block, chunk_w) f32 temporary stays <= ~4 vregs so
    # the three accumulators + slab + x_center are register-resident across taps.
    if chunk_w is None:
        chunk_w = ((16 * 1024) // (row_block * 4)) // 128 * 128
        chunk_w = int(min(max(128, chunk_w), 512))
    chunk_w = int(min(chunk_w, W_out))

    # ONE fused pad (rows + time) in a single HBM pass.  Edge mode provides the
    # 'replicate' conv padding; extra halo/tail lanes and padded rows only feed
    # outputs that are sliced off below.
    x2 = x.reshape(rows, T)
    x_in = jnp.pad(x2, ((0, R_pad - rows), (lead, W_in - lead - T)), mode="edge")

    # Depthwise weights, stacked [beta, alpha, mu_n_0] and replicated per batch
    # (row r = b*D + d), plus per-row bias.  Tiny (O(rows*K) floats).
    w = jnp.stack([beta_w.reshape(D, K),
                   alpha_w.reshape(D, K),
                   mu_n_0_w.reshape(D, K)], axis=0)                    # (3, D, K)
    w_rows = jnp.broadcast_to(w[:, None], (3, B, D, K)).reshape(3, rows, K)
    bias_rows = jnp.broadcast_to(bias.reshape(1, D), (B, D)).reshape(rows, 1)
    if R_pad > rows:
        pr = R_pad - rows
        w_rows = jnp.pad(w_rows, ((0, 0), (0, pr), (0, 0)))
        bias_rows = jnp.pad(bias_rows, ((0, pr), (0, 0)))

    kernel = functools.partial(_pcmn_kernel, kernel_size=K, center_tap=Lc,
                               chunk_w=chunk_w, compute_dtype=compute_dtype)

    in_bytes = row_block * W_in * itemsize
    out_bytes = row_block * W_out * itemsize
    vmem_limit = int(min(96 << 20, max(16 << 20,
                                       3 * (in_bytes + out_bytes) + (4 << 20))))

    out = pl.pallas_call(
        kernel,
        out_shape=jax.ShapeDtypeStruct((R_pad, W_out), x.dtype),
        grid_spec=pltpu.PrefetchScalarGridSpec(
            num_scalar_prefetch=0,
            grid=(R_pad // row_block,),
            in_specs=[
                pl.BlockSpec((row_block, W_in), lambda i: (i, 0)),
                pl.BlockSpec((3, row_block, K), lambda i: (0, i, 0)),
                pl.BlockSpec((row_block, 1), lambda i: (i, 0)),
            ],
            out_specs=pl.BlockSpec((row_block, W_out), lambda i: (i, 0)),
        ),
        compiler_params=pltpu.CompilerParams(
            dimension_semantics=("parallel",),
            vmem_limit_bytes=vmem_limit),
    )(x_in, w_rows, bias_rows)

    return out[:rows, :T_out].reshape(B, D, T_out)


def adaptive_pcmn_reference(x, beta_w, alpha_w, mu_n_0_w, bias, *,
                            left_context=-10, right_context=10, pad=True):
    """Pure-JAX reference (mirrors the PyTorch forward)."""
    K = right_context - left_context + 1
    T = x.shape[2]
    if pad:
        xpad = jnp.pad(x, ((0, 0), (0, 0), (-left_context, right_context)),
                       mode="edge")
        xc = x
    else:
        xpad = x
        xc = x[:, :, -left_context:T - right_context]
    Tc = xc.shape[2]

    def dwconv(w):  # w: (D, 1, K)
        out = jnp.zeros_like(xc)
        for k in range(K):
            out = out + w[:, 0, k][None, :, None] * xpad[:, :, k:k + Tc]
        return out + bias[None, :, None]

    beta = dwconv(beta_w) + 1.0
    alpha = dwconv(alpha_w)
    mu_n_0 = dwconv(mu_n_0_w)
    return beta * xc - alpha * mu_n_0


if __name__ == "__main__":
    # Module-consistent small shapes: batch=2, input_dim=8, frames=64,
    # left_context=-10, right_context=10 -> tot_context K=21 (<= frames).
    B, D, T = 2, 8, 64
    left_context, right_context = -10, 10
    K = right_context - left_context + 1

    key = jax.random.PRNGKey(0)
    k_x, k_b, k_a, k_m, k_bias = jax.random.split(key, 5)

    x = jax.random.normal(k_x, (B, D, T), dtype=jnp.float32)
    beta_w = 0.01 * jax.random.normal(k_b, (D, 1, K), dtype=jnp.float32)
    alpha_w = 0.01 * jax.random.normal(k_a, (D, 1, K), dtype=jnp.float32)
    mu_n_0_w = 0.01 * jax.random.normal(k_m, (D, 1, K), dtype=jnp.float32)
    # Nonzero bias to exercise the bias-folding path (module inits bias=0, but
    # the forward must be correct for any bias value).
    bias = 0.01 * jax.random.normal(k_bias, (D,), dtype=jnp.float32)

    # pad=True path.
    out = jax.block_until_ready(adaptive_pcmn(
        x, beta_w, alpha_w, mu_n_0_w, bias,
        left_context=left_context, right_context=right_context, pad=True))
    ref = jax.block_until_ready(adaptive_pcmn_reference(
        x, beta_w, alpha_w, mu_n_0_w, bias,
        left_context=left_context, right_context=right_context, pad=True))
    np.testing.assert_allclose(np.asarray(out), np.asarray(ref),
                               rtol=1e-5, atol=1e-5)

    # pad=False path.
    out_np = jax.block_until_ready(adaptive_pcmn(
        x, beta_w, alpha_w, mu_n_0_w, bias,
        left_context=left_context, right_context=right_context, pad=False))
    ref_np = jax.block_until_ready(adaptive_pcmn_reference(
        x, beta_w, alpha_w, mu_n_0_w, bias,
        left_context=left_context, right_context=right_context, pad=False))
    np.testing.assert_allclose(np.asarray(out_np), np.asarray(ref_np),
                               rtol=1e-5, atol=1e-5)

    print("KERNEL_OK")
</pallas_src>

<mosaic_0001>
module attributes {stable_mosaic.version = 11 : i64} {
  func.func @_pcmn_kernel(%arg0: i32, %arg1: memref<8x256xf32, #tpu.memory_space<vmem>>, %arg2: memref<3x8x21xf32, #tpu.memory_space<vmem>>, %arg3: memref<8x1xf32, #tpu.memory_space<vmem>>, %arg4: memref<8x128xf32, #tpu.memory_space<vmem>>) attributes {dimension_semantics = [#tpu.dimension_semantics<parallel>], iteration_bounds = array<i64: 2>, scalar_prefetch = 0 : i64, scratch_operands = 0 : i64, tpu.core_type = #tpu.core_type<tc>, window_params = [{transform_indices = @transform_0, window_bounds = array<i64: 8, 256>}, {transform_indices = @transform_1, window_bounds = array<i64: 3, 8, 21>}, {transform_indices = @transform_2, window_bounds = array<i64: 8, 1>}, {transform_indices = @transform_3, window_bounds = array<i64: 8, 128>}]} {
    %c0 = arith.constant 0 : index
    %c0_0 = arith.constant 0 : index
    %c0_1 = arith.constant 0 : index
    %0 = vector.load %arg2[%c0, %c0_0, %c0_1] : memref<3x8x21xf32, #tpu.memory_space<vmem>>, vector<3x8x21xf32>
    %c0_2 = arith.constant 0 : index
    %c0_3 = arith.constant 0 : index
    %1 = vector.load %arg3[%c0_2, %c0_3] : memref<8x1xf32, #tpu.memory_space<vmem>>, vector<8x1xf32>
    %2 = vector.extract_strided_slice %0 {offsets = [0, 0, 0], sizes = [1, 8, 1], strides = [1, 1, 1]} : vector<3x8x21xf32> to vector<1x8x1xf32>
    %3 = vector.shape_cast %2 : vector<1x8x1xf32> to vector<8x1xf32>
    %4 = vector.extract_strided_slice %0 {offsets = [0, 0, 1], sizes = [1, 8, 1], strides = [1, 1, 1]} : vector<3x8x21xf32> to vector<1x8x1xf32>
    %5 = vector.shape_cast %4 : vector<1x8x1xf32> to vector<8x1xf32>
    %6 = vector.extract_strided_slice %0 {offsets = [0, 0, 2], sizes = [1, 8, 1], strides = [1, 1, 1]} : vector<3x8x21xf32> to vector<1x8x1xf32>
    %7 = vector.shape_cast %6 : vector<1x8x1xf32> to vector<8x1xf32>
    %8 = vector.extract_strided_slice %0 {offsets = [0, 0, 3], sizes = [1, 8, 1], strides = [1, 1, 1]} : vector<3x8x21xf32> to vector<1x8x1xf32>
    %9 = vector.shape_cast %8 : vector<1x8x1xf32> to vector<8x1xf32>
    %10 = vector.extract_strided_slice %0 {offsets = [0, 0, 4], sizes = [1, 8, 1], strides = [1, 1, 1]} : vector<3x8x21xf32> to vector<1x8x1xf32>
    %11 = vector.shape_cast %10 : vector<1x8x1xf32> to vector<8x1xf32>
    %12 = vector.extract_strided_slice %0 {offsets = [0, 0, 5], sizes = [1, 8, 1], strides = [1, 1, 1]} : vector<3x8x21xf32> to vector<1x8x1xf32>
    %13 = vector.shape_cast %12 : vector<1x8x1xf32> to vector<8x1xf32>
    %14 = vector.extract_strided_slice %0 {offsets = [0, 0, 6], sizes = [1, 8, 1], strides = [1, 1, 1]} : vector<3x8x21xf32> to vector<1x8x1xf32>
    %15 = vector.shape_cast %14 : vector<1x8x1xf32> to vector<8x1xf32>
    %16 = vector.extract_strided_slice %0 {offsets = [0, 0, 7], sizes = [1, 8, 1], strides = [1, 1, 1]} : vector<3x8x21xf32> to vector<1x8x1xf32>
    %17 = vector.shape_cast %16 : vector<1x8x1xf32> to vector<8x1xf32>
    %18 = vector.extract_strided_slice %0 {offsets = [0, 0, 8], sizes = [1, 8, 1], strides = [1, 1, 1]} : vector<3x8x21xf32> to vector<1x8x1xf32>
    %19 = vector.shape_cast %18 : vector<1x8x1xf32> to vector<8x1xf32>
    %20 = vector.extract_strided_slice %0 {offsets = [0, 0, 9], sizes = [1, 8, 1], strides = [1, 1, 1]} : vector<3x8x21xf32> to vector<1x8x1xf32>
    %21 = vector.shape_cast %20 : vector<1x8x1xf32> to vector<8x1xf32>
    %22 = vector.extract_strided_slice %0 {offsets = [0, 0, 10], sizes = [1, 8, 1], strides = [1, 1, 1]} : vector<3x8x21xf32> to vector<1x8x1xf32>
    %23 = vector.shape_cast %22 : vector<1x8x1xf32> to vector<8x1xf32>
    %24 = vector.extract_strided_slice %0 {offsets = [0, 0, 11], sizes = [1, 8, 1], strides = [1, 1, 1]} : vector<3x8x21xf32> to vector<1x8x1xf32>
    %25 = vector.shape_cast %24 : vector<1x8x1xf32> to vector<8x1xf32>
    %26 = vector.extract_strided_slice %0 {offsets = [0, 0, 12], sizes = [1, 8, 1], strides = [1, 1, 1]} : vector<3x8x21xf32> to vector<1x8x1xf32>
    %27 = vector.shape_cast %26 : vector<1x8x1xf32> to vector<8x1xf32>
    %28 = vector.extract_strided_slice %0 {offsets = [0, 0, 13], sizes = [1, 8, 1], strides = [1, 1, 1]} : vector<3x8x21xf32> to vector<1x8x1xf32>
    %29 = vector.shape_cast %28 : vector<1x8x1xf32> to vector<8x1xf32>
    %30 = vector.extract_strided_slice %0 {offsets = [0, 0, 14], sizes = [1, 8, 1], strides = [1, 1, 1]} : vector<3x8x21xf32> to vector<1x8x1xf32>
    %31 = vector.shape_cast %30 : vector<1x8x1xf32> to vector<8x1xf32>
    %32 = vector.extract_strided_slice %0 {offsets = [0, 0, 15], sizes = [1, 8, 1], strides = [1, 1, 1]} : vector<3x8x21xf32> to vector<1x8x1xf32>
    %33 = vector.shape_cast %32 : vector<1x8x1xf32> to vector<8x1xf32>
    %34 = vector.extract_strided_slice %0 {offsets = [0, 0, 16], sizes = [1, 8, 1], strides = [1, 1, 1]} : vector<3x8x21xf32> to vector<1x8x1xf32>
    %35 = vector.shape_cast %34 : vector<1x8x1xf32> to vector<8x1xf32>
    %36 = vector.extract_strided_slice %0 {offsets = [0, 0, 17], sizes = [1, 8, 1], strides = [1, 1, 1]} : vector<3x8x21xf32> to vector<1x8x1xf32>
    %37 = vector.shape_cast %36 : vector<1x8x1xf32> to vector<8x1xf32>
    %38 = vector.extract_strided_slice %0 {offsets = [0, 0, 18], sizes = [1, 8, 1], strides = [1, 1, 1]} : vector<3x8x21xf32> to vector<1x8x1xf32>
    %39 = vector.shape_cast %38 : vector<1x8x1xf32> to vector<8x1xf32>
    %40 = vector.extract_strided_slice %0 {offsets = [0, 0, 19], sizes = [1, 8, 1], strides = [1, 1, 1]} : vector<3x8x21xf32> to vector<1x8x1xf32>
    %41 = vector.shape_cast %40 : vector<1x8x1xf32> to vector<8x1xf32>
    %42 = vector.extract_strided_slice %0 {offsets = [0, 0, 20], sizes = [1, 8, 1], strides = [1, 1, 1]} : vector<3x8x21xf32> to vector<1x8x1xf32>
    %43 = vector.shape_cast %42 : vector<1x8x1xf32> to vector<8x1xf32>
    %44 = vector.extract_strided_slice %0 {offsets = [1, 0, 0], sizes = [1, 8, 1], strides = [1, 1, 1]} : vector<3x8x21xf32> to vector<1x8x1xf32>
    %45 = vector.shape_cast %44 : vector<1x8x1xf32> to vector<8x1xf32>
    %46 = vector.extract_strided_slice %0 {offsets = [1, 0, 1], sizes = [1, 8, 1], strides = [1, 1, 1]} : vector<3x8x21xf32> to vector<1x8x1xf32>
    %47 = vector.shape_cast %46 : vector<1x8x1xf32> to vector<8x1xf32>
    %48 = vector.extract_strided_slice %0 {offsets = [1, 0, 2], sizes = [1, 8, 1], strides = [1, 1, 1]} : vector<3x8x21xf32> to vector<1x8x1xf32>
    %49 = vector.shape_cast %48 : vector<1x8x1xf32> to vector<8x1xf32>
    %50 = vector.extract_strided_slice %0 {offsets = [1, 0, 3], sizes = [1, 8, 1], strides = [1, 1, 1]} : vector<3x8x21xf32> to vector<1x8x1xf32>
    %51 = vector.shape_cast %50 : vector<1x8x1xf32> to vector<8x1xf32>
    %52 = vector.extract_strided_slice %0 {offsets = [1, 0, 4], sizes = [1, 8, 1], strides = [1, 1, 1]} : vector<3x8x21xf32> to vector<1x8x1xf32>
    %53 = vector.shape_cast %52 : vector<1x8x1xf32> to vector<8x1xf32>
    %54 = vector.extract_strided_slice %0 {offsets = [1, 0, 5], sizes = [1, 8, 1], strides = [1, 1, 1]} : vector<3x8x21xf32> to vector<1x8x1xf32>
    %55 = vector.shape_cast %54 : vector<1x8x1xf32> to vector<8x1xf32>
    %56 = vector.extract_strided_slice %0 {offsets = [1, 0, 6], sizes = [1, 8, 1], strides = [1, 1, 1]} : vector<3x8x21xf32> to vector<1x8x1xf32>
    %57 = vector.shape_cast %56 : vector<1x8x1xf32> to vector<8x1xf32>
    %58 = vector.extract_strided_slice %0 {offsets = [1, 0, 7], sizes = [1, 8, 1], strides = [1, 1, 1]} : vector<3x8x21xf32> to vector<1x8x1xf32>
    %59 = vector.shape_cast %58 : vector<1x8x1xf32> to vector<8x1xf32>
    %60 = vector.extract_strided_slice %0 {offsets = [1, 0, 8], sizes = [1, 8, 1], strides = [1, 1, 1]} : vector<3x8x21xf32> to vector<1x8x1xf32>
    %61 = vector.shape_cast %60 : vector<1x8x1xf32> to vector<8x1xf32>
    %62 = vector.extract_strided_slice %0 {offsets = [1, 0, 9], sizes = [1, 8, 1], strides = [1, 1, 1]} : vector<3x8x21xf32> to vector<1x8x1xf32>
    %63 = vector.shape_cast %62 : vector<1x8x1xf32> to vector<8x1xf32>
    %64 = vector.extract_strided_slice %0 {offsets = [1, 0, 10], sizes = [1, 8, 1], strides = [1, 1, 1]} : vector<3x8x21xf32> to vector<1x8x1xf32>
    %65 = vector.shape_cast %64 : vector<1x8x1xf32> to vector<8x1xf32>
    %66 = vector.extract_strided_slice %0 {offsets = [1, 0, 11], sizes = [1, 8, 1], strides = [1, 1, 1]} : vector<3x8x21xf32> to vector<1x8x1xf32>
    %67 = vector.shape_cast %66 : vector<1x8x1xf32> to vector<8x1xf32>
    %68 = vector.extract_strided_slice %0 {offsets = [1, 0, 12], sizes = [1, 8, 1], strides = [1, 1, 1]} : vector<3x8x21xf32> to vector<1x8x1xf32>
    %69 = vector.shape_cast %68 : vector<1x8x1xf32> to vector<8x1xf32>
    %70 = vector.extract_strided_slice %0 {offsets = [1, 0, 13], sizes = [1, 8, 1], strides = [1, 1, 1]} : vector<3x8x21xf32> to vector<1x8x1xf32>
    %71 = vector.shape_cast %70 : vector<1x8x1xf32> to vector<8x1xf32>
    %72 = vector.extract_strided_slice %0 {offsets = [1, 0, 14], sizes = [1, 8, 1], strides = [1, 1, 1]} : vector<3x8x21xf32> to vector<1x8x1xf32>
    %73 = vector.shape_cast %72 : vector<1x8x1xf32> to vector<8x1xf32>
    %74 = vector.extract_strided_slice %0 {offsets = [1, 0, 15], sizes = [1, 8, 1], strides = [1, 1, 1]} : vector<3x8x21xf32> to vector<1x8x1xf32>
    %75 = vector.shape_cast %74 : vector<1x8x1xf32> to vector<8x1xf32>
    %76 = vector.extract_strided_slice %0 {offsets = [1, 0, 16], sizes = [1, 8, 1], strides = [1, 1, 1]} : vector<3x8x21xf32> to vector<1x8x1xf32>
    %77 = vector.shape_cast %76 : vector<1x8x1xf32> to vector<8x1xf32>
    %78 = vector.extract_strided_slice %0 {offsets = [1, 0, 17], sizes = [1, 8, 1], strides = [1, 1, 1]} : vector<3x8x21xf32> to vector<1x8x1xf32>
    %79 = vector.shape_cast %78 : vector<1x8x1xf32> to vector<8x1xf32>
    %80 = vector.extract_strided_slice %0 {offsets = [1, 0, 18], sizes = [1, 8, 1], strides = [1, 1, 1]} : vector<3x8x21xf32> to vector<1x8x1xf32>
    %81 = vector.shape_cast %80 : vector<1x8x1xf32> to vector<8x1xf32>
    %82 = vector.extract_strided_slice %0 {offsets = [1, 0, 19], sizes = [1, 8, 1], strides = [1, 1, 1]} : vector<3x8x21xf32> to vector<1x8x1xf32>
    %83 = vector.shape_cast %82 : vector<1x8x1xf32> to vector<8x1xf32>
    %84 = vector.extract_strided_slice %0 {offsets = [1, 0, 20], sizes = [1, 8, 1], strides = [1, 1, 1]} : vector<3x8x21xf32> to vector<1x8x1xf32>
    %85 = vector.shape_cast %84 : vector<1x8x1xf32> to vector<8x1xf32>
    %86 = vector.extract_strided_slice %0 {offsets = [2, 0, 0], sizes = [1, 8, 1], strides = [1, 1, 1]} : vector<3x8x21xf32> to vector<1x8x1xf32>
    %87 = vector.shape_cast %86 : vector<1x8x1xf32> to vector<8x1xf32>
    %88 = vector.extract_strided_slice %0 {offsets = [2, 0, 1], sizes = [1, 8, 1], strides = [1, 1, 1]} : vector<3x8x21xf32> to vector<1x8x1xf32>
    %89 = vector.shape_cast %88 : vector<1x8x1xf32> to vector<8x1xf32>
    %90 = vector.extract_strided_slice %0 {offsets = [2, 0, 2], sizes = [1, 8, 1], strides = [1, 1, 1]} : vector<3x8x21xf32> to vector<1x8x1xf32>
    %91 = vector.shape_cast %90 : vector<1x8x1xf32> to vector<8x1xf32>
    %92 = vector.extract_strided_slice %0 {offsets = [2, 0, 3], sizes = [1, 8, 1], strides = [1, 1, 1]} : vector<3x8x21xf32> to vector<1x8x1xf32>
    %93 = vector.shape_cast %92 : vector<1x8x1xf32> to vector<8x1xf32>
    %94 = vector.extract_strided_slice %0 {offsets = [2, 0, 4], sizes = [1, 8, 1], strides = [1, 1, 1]} : vector<3x8x21xf32> to vector<1x8x1xf32>
    %95 = vector.shape_cast %94 : vector<1x8x1xf32> to vector<8x1xf32>
    %96 = vector.extract_strided_slice %0 {offsets = [2, 0, 5], sizes = [1, 8, 1], strides = [1, 1, 1]} : vector<3x8x21xf32> to vector<1x8x1xf32>
    %97 = vector.shape_cast %96 : vector<1x8x1xf32> to vector<8x1xf32>
    %98 = vector.extract_strided_slice %0 {offsets = [2, 0, 6], sizes = [1, 8, 1], strides = [1, 1, 1]} : vector<3x8x21xf32> to vector<1x8x1xf32>
    %99 = vector.shape_cast %98 : vector<1x8x1xf32> to vector<8x1xf32>
    %100 = vector.extract_strided_slice %0 {offsets = [2, 0, 7], sizes = [1, 8, 1], strides = [1, 1, 1]} : vector<3x8x21xf32> to vector<1x8x1xf32>
    %101 = vector.shape_cast %100 : vector<1x8x1xf32> to vector<8x1xf32>
    %102 = vector.extract_strided_slice %0 {offsets = [2, 0, 8], sizes = [1, 8, 1], strides = [1, 1, 1]} : vector<3x8x21xf32> to vector<1x8x1xf32>
    %103 = vector.shape_cast %102 : vector<1x8x1xf32> to vector<8x1xf32>
    %104 = vector.extract_strided_slice %0 {offsets = [2, 0, 9], sizes = [1, 8, 1], strides = [1, 1, 1]} : vector<3x8x21xf32> to vector<1x8x1xf32>
    %105 = vector.shape_cast %104 : vector<1x8x1xf32> to vector<8x1xf32>
    %106 = vector.extract_strided_slice %0 {offsets = [2, 0, 10], sizes = [1, 8, 1], strides = [1, 1, 1]} : vector<3x8x21xf32> to vector<1x8x1xf32>
    %107 = vector.shape_cast %106 : vector<1x8x1xf32> to vector<8x1xf32>
    %108 = vector.extract_strided_slice %0 {offsets = [2, 0, 11], sizes = [1, 8, 1], strides = [1, 1, 1]} : vector<3x8x21xf32> to vector<1x8x1xf32>
    %109 = vector.shape_cast %108 : vector<1x8x1xf32> to vector<8x1xf32>
    %110 = vector.extract_strided_slice %0 {offsets = [2, 0, 12], sizes = [1, 8, 1], strides = [1, 1, 1]} : vector<3x8x21xf32> to vector<1x8x1xf32>
    %111 = vector.shape_cast %110 : vector<1x8x1xf32> to vector<8x1xf32>
    %112 = vector.extract_strided_slice %0 {offsets = [2, 0, 13], sizes = [1, 8, 1], strides = [1, 1, 1]} : vector<3x8x21xf32> to vector<1x8x1xf32>
    %113 = vector.shape_cast %112 : vector<1x8x1xf32> to vector<8x1xf32>
    %114 = vector.extract_strided_slice %0 {offsets = [2, 0, 14], sizes = [1, 8, 1], strides = [1, 1, 1]} : vector<3x8x21xf32> to vector<1x8x1xf32>
    %115 = vector.shape_cast %114 : vector<1x8x1xf32> to vector<8x1xf32>
    %116 = vector.extract_strided_slice %0 {offsets = [2, 0, 15], sizes = [1, 8, 1], strides = [1, 1, 1]} : vector<3x8x21xf32> to vector<1x8x1xf32>
    %117 = vector.shape_cast %116 : vector<1x8x1xf32> to vector<8x1xf32>
    %118 = vector.extract_strided_slice %0 {offsets = [2, 0, 16], sizes = [1, 8, 1], strides = [1, 1, 1]} : vector<3x8x21xf32> to vector<1x8x1xf32>
    %119 = vector.shape_cast %118 : vector<1x8x1xf32> to vector<8x1xf32>
    %120 = vector.extract_strided_slice %0 {offsets = [2, 0, 17], sizes = [1, 8, 1], strides = [1, 1, 1]} : vector<3x8x21xf32> to vector<1x8x1xf32>
    %121 = vector.shape_cast %120 : vector<1x8x1xf32> to vector<8x1xf32>
    %122 = vector.extract_strided_slice %0 {offsets = [2, 0, 18], sizes = [1, 8, 1], strides = [1, 1, 1]} : vector<3x8x21xf32> to vector<1x8x1xf32>
    %123 = vector.shape_cast %122 : vector<1x8x1xf32> to vector<8x1xf32>
    %124 = vector.extract_strided_slice %0 {offsets = [2, 0, 19], sizes = [1, 8, 1], strides = [1, 1, 1]} : vector<3x8x21xf32> to vector<1x8x1xf32>
    %125 = vector.shape_cast %124 : vector<1x8x1xf32> to vector<8x1xf32>
    %126 = vector.extract_strided_slice %0 {offsets = [2, 0, 20], sizes = [1, 8, 1], strides = [1, 1, 1]} : vector<3x8x21xf32> to vector<1x8x1xf32>
    %127 = vector.shape_cast %126 : vector<1x8x1xf32> to vector<8x1xf32>
    %cst = arith.constant 1.000000e+00 : f32
    %128 = vector.broadcast %cst : f32 to vector<8x1xf32>
    %129 = arith.addf %1, %128 : vector<8x1xf32>
    %130 = vector.shape_cast %129 : vector<8x1xf32> to vector<8x1xf32>
    %131 = vector.broadcast %130 : vector<8x1xf32> to vector<8x128xf32>
    %132 = vector.shape_cast %1 : vector<8x1xf32> to vector<8x1xf32>
    %133 = vector.broadcast %132 : vector<8x1xf32> to vector<8x128xf32>
    %c0_i32 = arith.constant 0 : i32
    %c128_i32 = arith.constant 128 : i32
    %134 = arith.muli %c0_i32, %c128_i32 : i32
    %c0_i32_4 = arith.constant 0 : i32
    %135 = arith.minsi %134, %c0_i32_4 : i32
    %136 = tpu.assume_multiple %135, 128 : i32
    %c0_5 = arith.constant 0 : index
    %137 = arith.index_cast %136 : i32 to index
    %138 = vector.load %arg1[%c0_5, %137] : memref<8x256xf32, #tpu.memory_space<vmem>>, vector<8x256xf32>
    %139 = vector.extract_strided_slice %138 {offsets = [0, 0], sizes = [8, 128], strides = [1, 1]} : vector<8x256xf32> to vector<8x128xf32>
    %140 = vector.broadcast %3 : vector<8x1xf32> to vector<8x128xf32>
    %141 = arith.mulf %140, %139 : vector<8x128xf32>
    %142 = arith.addf %131, %141 : vector<8x128xf32>
    %143 = vector.broadcast %45 : vector<8x1xf32> to vector<8x128xf32>
    %144 = arith.mulf %143, %139 : vector<8x128xf32>
    %145 = arith.addf %133, %144 : vector<8x128xf32>
    %146 = vector.broadcast %87 : vector<8x1xf32> to vector<8x128xf32>
    %147 = arith.mulf %146, %139 : vector<8x128xf32>
    %148 = arith.addf %133, %147 : vector<8x128xf32>
    %c255_i32 = arith.constant 255 : i32
    %149 = tpu.dynamic_rotate %138 by %c255_i32 dim 1 : vector<8x256xf32>, i32 -> vector<8x256xf32>
    %150 = vector.extract_strided_slice %149 {offsets = [0, 0], sizes = [8, 128], strides = [1, 1]} : vector<8x256xf32> to vector<8x128xf32>
    %151 = vector.broadcast %5 : vector<8x1xf32> to vector<8x128xf32>
    %152 = arith.mulf %151, %150 : vector<8x128xf32>
    %153 = arith.addf %142, %152 : vector<8x128xf32>
    %154 = vector.broadcast %47 : vector<8x1xf32> to vector<8x128xf32>
    %155 = arith.mulf %154, %150 : vector<8x128xf32>
    %156 = arith.addf %145, %155 : vector<8x128xf32>
    %157 = vector.broadcast %89 : vector<8x1xf32> to vector<8x128xf32>
    %158 = arith.mulf %157, %150 : vector<8x128xf32>
    %159 = arith.addf %148, %158 : vector<8x128xf32>
    %c254_i32 = arith.constant 254 : i32
    %160 = tpu.dynamic_rotate %138 by %c254_i32 dim 1 : vector<8x256xf32>, i32 -> vector<8x256xf32>
    %161 = vector.extract_strided_slice %160 {offsets = [0, 0], sizes = [8, 128], strides = [1, 1]} : vector<8x256xf32> to vector<8x128xf32>
    %162 = vector.broadcast %7 : vector<8x1xf32> to vector<8x128xf32>
    %163 = arith.mulf %162, %161 : vector<8x128xf32>
    %164 = arith.addf %153, %163 : vector<8x128xf32>
    %165 = vector.broadcast %49 : vector<8x1xf32> to vector<8x128xf32>
    %166 = arith.mulf %165, %161 : vector<8x128xf32>
    %167 = arith.addf %156, %166 : vector<8x128xf32>
    %168 = vector.broadcast %91 : vector<8x1xf32> to vector<8x128xf32>
    %169 = arith.mulf %168, %161 : vector<8x128xf32>
    %170 = arith.addf %159, %169 : vector<8x128xf32>
    %c253_i32 = arith.constant 253 : i32
    %171 = tpu.dynamic_rotate %138 by %c253_i32 dim 1 : vector<8x256xf32>, i32 -> vector<8x256xf32>
    %172 = vector.extract_strided_slice %171 {offsets = [0, 0], sizes = [8, 128], strides = [1, 1]} : vector<8x256xf32> to vector<8x128xf32>
    %173 = vector.broadcast %9 : vector<8x1xf32> to vector<8x128xf32>
    %174 = arith.mulf %173, %172 : vector<8x128xf32>
    %175 = arith.addf %164, %174 : vector<8x128xf32>
    %176 = vector.broadcast %51 : vector<8x1xf32> to vector<8x128xf32>
    %177 = arith.mulf %176, %172 : vector<8x128xf32>
    %178 = arith.addf %167, %177 : vector<8x128xf32>
    %179 = vector.broadcast %93 : vector<8x1xf32> to vector<8x128xf32>
    %180 = arith.mulf %179, %172 : vector<8x128xf32>
    %181 = arith.addf %170, %180 : vector<8x128xf32>
    %c252_i32 = arith.constant 252 : i32
    %182 = tpu.dynamic_rotate %138 by %c252_i32 dim 1 : vector<8x256xf32>, i32 -> vector<8x256xf32>
    %183 = vector.extract_strided_slice %182 {offsets = [0, 0], sizes = [8, 128], strides = [1, 1]} : vector<8x256xf32> to vector<8x128xf32>
    %184 = vector.broadcast %11 : vector<8x1xf32> to vector<8x128xf32>
    %185 = arith.mulf %184, %183 : vector<8x128xf32>
    %186 = arith.addf %175, %185 : vector<8x128xf32>
    %187 = vector.broadcast %53 : vector<8x1xf32> to vector<8x128xf32>
    %188 = arith.mulf %187, %183 : vector<8x128xf32>
    %189 = arith.addf %178, %188 : vector<8x128xf32>
    %190 = vector.broadcast %95 : vector<8x1xf32> to vector<8x128xf32>
    %191 = arith.mulf %190, %183 : vector<8x128xf32>
    %192 = arith.addf %181, %191 : vector<8x128xf32>
    %c251_i32 = arith.constant 251 : i32
    %193 = tpu.dynamic_rotate %138 by %c251_i32 dim 1 : vector<8x256xf32>, i32 -> vector<8x256xf32>
    %194 = vector.extract_strided_slice %193 {offsets = [0, 0], sizes = [8, 128], strides = [1, 1]} : vector<8x256xf32> to vector<8x128xf32>
    %195 = vector.broadcast %13 : vector<8x1xf32> to vector<8x128xf32>
    %196 = arith.mulf %195, %194 : vector<8x128xf32>
    %197 = arith.addf %186, %196 : vector<8x128xf32>
    %198 = vector.broadcast %55 : vector<8x1xf32> to vector<8x128xf32>
    %199 = arith.mulf %198, %194 : vector<8x128xf32>
    %200 = arith.addf %189, %199 : vector<8x128xf32>
    %201 = vector.broadcast %97 : vector<8x1xf32> to vector<8x128xf32>
    %202 = arith.mulf %201, %194 : vector<8x128xf32>
    %203 = arith.addf %192, %202 : vector<8x128xf32>
    %c250_i32 = arith.constant 250 : i32
    %204 = tpu.dynamic_rotate %138 by %c250_i32 dim 1 : vector<8x256xf32>, i32 -> vector<8x256xf32>
    %205 = vector.extract_strided_slice %204 {offsets = [0, 0], sizes = [8, 128], strides = [1, 1]} : vector<8x256xf32> to vector<8x128xf32>
    %206 = vector.broadcast %15 : vector<8x1xf32> to vector<8x128xf32>
    %207 = arith.mulf %206, %205 : vector<8x128xf32>
    %208 = arith.addf %197, %207 : vector<8x128xf32>
    %209 = vector.broadcast %57 : vector<8x1xf32> to vector<8x128xf32>
    %210 = arith.mulf %209, %205 : vector<8x128xf32>
    %211 = arith.addf %200, %210 : vector<8x128xf32>
    %212 = vector.broadcast %99 : vector<8x1xf32> to vector<8x128xf32>
    %213 = arith.mulf %212, %205 : vector<8x128xf32>
    %214 = arith.addf %203, %213 : vector<8x128xf32>
    %c249_i32 = arith.constant 249 : i32
    %215 = tpu.dynamic_rotate %138 by %c249_i32 dim 1 : vector<8x256xf32>, i32 -> vector<8x256xf32>
    %216 = vector.extract_strided_slice %215 {offsets = [0, 0], sizes = [8, 128], strides = [1, 1]} : vector<8x256xf32> to vector<8x128xf32>
    %217 = vector.broadcast %17 : vector<8x1xf32> to vector<8x128xf32>
    %218 = arith.mulf %217, %216 : vector<8x128xf32>
    %219 = arith.addf %208, %218 : vector<8x128xf32>
    %220 = vector.broadcast %59 : vector<8x1xf32> to vector<8x128xf32>
    %221 = arith.mulf %220, %216 : vector<8x128xf32>
    %222 = arith.addf %211, %221 : vector<8x128xf32>
    %223 = vector.broadcast %101 : vector<8x1xf32> to vector<8x128xf32>
    %224 = arith.mulf %223, %216 : vector<8x128xf32>
    %225 = arith.addf %214, %224 : vector<8x128xf32>
    %c248_i32 = arith.constant 248 : i32
    %226 = tpu.dynamic_rotate %138 by %c248_i32 dim 1 : vector<8x256xf32>, i32 -> vector<8x256xf32>
    %227 = vector.extract_strided_slice %226 {offsets = [0, 0], sizes = [8, 128], strides = [1, 1]} : vector<8x256xf32> to vector<8x128xf32>
    %228 = vector.broadcast %19 : vector<8x1xf32> to vector<8x128xf32>
    %229 = arith.mulf %228, %227 : vector<8x128xf32>
    %230 = arith.addf %219, %229 : vector<8x128xf32>
    %231 = vector.broadcast %61 : vector<8x1xf32> to vector<8x128xf32>
    %232 = arith.mulf %231, %227 : vector<8x128xf32>
    %233 = arith.addf %222, %232 : vector<8x128xf32>
    %234 = vector.broadcast %103 : vector<8x1xf32> to vector<8x128xf32>
    %235 = arith.mulf %234, %227 : vector<8x128xf32>
    %236 = arith.addf %225, %235 : vector<8x128xf32>
    %c247_i32 = arith.constant 247 : i32
    %237 = tpu.dynamic_rotate %138 by %c247_i32 dim 1 : vector<8x256xf32>, i32 -> vector<8x256xf32>
    %238 = vector.extract_strided_slice %237 {offsets = [0, 0], sizes = [8, 128], strides = [1, 1]} : vector<8x256xf32> to vector<8x128xf32>
    %239 = vector.broadcast %21 : vector<8x1xf32> to vector<8x128xf32>
    %240 = arith.mulf %239, %238 : vector<8x128xf32>
    %241 = arith.addf %230, %240 : vector<8x128xf32>
    %242 = vector.broadcast %63 : vector<8x1xf32> to vector<8x128xf32>
    %243 = arith.mulf %242, %238 : vector<8x128xf32>
    %244 = arith.addf %233, %243 : vector<8x128xf32>
    %245 = vector.broadcast %105 : vector<8x1xf32> to vector<8x128xf32>
    %246 = arith.mulf %245, %238 : vector<8x128xf32>
    %247 = arith.addf %236, %246 : vector<8x128xf32>
    %c246_i32 = arith.constant 246 : i32
    %248 = tpu.dynamic_rotate %138 by %c246_i32 dim 1 : vector<8x256xf32>, i32 -> vector<8x256xf32>
    %249 = vector.extract_strided_slice %248 {offsets = [0, 0], sizes = [8, 128], strides = [1, 1]} : vector<8x256xf32> to vector<8x128xf32>
    %250 = vector.broadcast %23 : vector<8x1xf32> to vector<8x128xf32>
    %251 = arith.mulf %250, %249 : vector<8x128xf32>
    %252 = arith.addf %241, %251 : vector<8x128xf32>
    %253 = vector.broadcast %65 : vector<8x1xf32> to vector<8x128xf32>
    %254 = arith.mulf %253, %249 : vector<8x128xf32>
    %255 = arith.addf %244, %254 : vector<8x128xf32>
    %256 = vector.broadcast %107 : vector<8x1xf32> to vector<8x128xf32>
    %257 = arith.mulf %256, %249 : vector<8x128xf32>
    %258 = arith.addf %247, %257 : vector<8x128xf32>
    %c245_i32 = arith.constant 245 : i32
    %259 = tpu.dynamic_rotate %138 by %c245_i32 dim 1 : vector<8x256xf32>, i32 -> vector<8x256xf32>
    %260 = vector.extract_strided_slice %259 {offsets = [0, 0], sizes = [8, 128], strides = [1, 1]} : vector<8x256xf32> to vector<8x128xf32>
    %261 = vector.broadcast %25 : vector<8x1xf32> to vector<8x128xf32>
    %262 = arith.mulf %261, %260 : vector<8x128xf32>
    %263 = arith.addf %252, %262 : vector<8x128xf32>
    %264 = vector.broadcast %67 : vector<8x1xf32> to vector<8x128xf32>
    %265 = arith.mulf %264, %260 : vector<8x128xf32>
    %266 = arith.addf %255, %265 : vector<8x128xf32>
    %267 = vector.broadcast %109 : vector<8x1xf32> to vector<8x128xf32>
    %268 = arith.mulf %267, %260 : vector<8x128xf32>
    %269 = arith.addf %258, %268 : vector<8x128xf32>
    %c244_i32 = arith.constant 244 : i32
    %270 = tpu.dynamic_rotate %138 by %c244_i32 dim 1 : vector<8x256xf32>, i32 -> vector<8x256xf32>
    %271 = vector.extract_strided_slice %270 {offsets = [0, 0], sizes = [8, 128], strides = [1, 1]} : vector<8x256xf32> to vector<8x128xf32>
    %272 = vector.broadcast %27 : vector<8x1xf32> to vector<8x128xf32>
    %273 = arith.mulf %272, %271 : vector<8x128xf32>
    %274 = arith.addf %263, %273 : vector<8x128xf32>
    %275 = vector.broadcast %69 : vector<8x1xf32> to vector<8x128xf32>
    %276 = arith.mulf %275, %271 : vector<8x128xf32>
    %277 = arith.addf %266, %276 : vector<8x128xf32>
    %278 = vector.broadcast %111 : vector<8x1xf32> to vector<8x128xf32>
    %279 = arith.mulf %278, %271 : vector<8x128xf32>
    %280 = arith.addf %269, %279 : vector<8x128xf32>
    %c243_i32 = arith.constant 243 : i32
    %281 = tpu.dynamic_rotate %138 by %c243_i32 dim 1 : vector<8x256xf32>, i32 -> vector<8x256xf32>
    %282 = vector.extract_strided_slice %281 {offsets = [0, 0], sizes = [8, 128], strides = [1, 1]} : vector<8x256xf32> to vector<8x128xf32>
    %283 = vector.broadcast %29 : vector<8x1xf32> to vector<8x128xf32>
    %284 = arith.mulf %283, %282 : vector<8x128xf32>
    %285 = arith.addf %274, %284 : vector<8x128xf32>
    %286 = vector.broadcast %71 : vector<8x1xf32> to vector<8x128xf32>
    %287 = arith.mulf %286, %282 : vector<8x128xf32>
    %288 = arith.addf %277, %287 : vector<8x128xf32>
    %289 = vector.broadcast %113 : vector<8x1xf32> to vector<8x128xf32>
    %290 = arith.mulf %289, %282 : vector<8x128xf32>
    %291 = arith.addf %280, %290 : vector<8x128xf32>
    %c242_i32 = arith.constant 242 : i32
    %292 = tpu.dynamic_rotate %138 by %c242_i32 dim 1 : vector<8x256xf32>, i32 -> vector<8x256xf32>
    %293 = vector.extract_strided_slice %292 {offsets = [0, 0], sizes = [8, 128], strides = [1, 1]} : vector<8x256xf32> to vector<8x128xf32>
    %294 = vector.broadcast %31 : vector<8x1xf32> to vector<8x128xf32>
    %295 = arith.mulf %294, %293 : vector<8x128xf32>
    %296 = arith.addf %285, %295 : vector<8x128xf32>
    %297 = vector.broadcast %73 : vector<8x1xf32> to vector<8x128xf32>
    %298 = arith.mulf %297, %293 : vector<8x128xf32>
    %299 = arith.addf %288, %298 : vector<8x128xf32>
    %300 = vector.broadcast %115 : vector<8x1xf32> to vector<8x128xf32>
    %301 = arith.mulf %300, %293 : vector<8x128xf32>
    %302 = arith.addf %291, %301 : vector<8x128xf32>
    %c241_i32 = arith.constant 241 : i32
    %303 = tpu.dynamic_rotate %138 by %c241_i32 dim 1 : vector<8x256xf32>, i32 -> vector<8x256xf32>
    %304 = vector.extract_strided_slice %303 {offsets = [0, 0], sizes = [8, 128], strides = [1, 1]} : vector<8x256xf32> to vector<8x128xf32>
    %305 = vector.broadcast %33 : vector<8x1xf32> to vector<8x128xf32>
    %306 = arith.mulf %305, %304 : vector<8x128xf32>
    %307 = arith.addf %296, %306 : vector<8x128xf32>
    %308 = vector.broadcast %75 : vector<8x1xf32> to vector<8x128xf32>
    %309 = arith.mulf %308, %304 : vector<8x128xf32>
    %310 = arith.addf %299, %309 : vector<8x128xf32>
    %311 = vector.broadcast %117 : vector<8x1xf32> to vector<8x128xf32>
    %312 = arith.mulf %311, %304 : vector<8x128xf32>
    %313 = arith.addf %302, %312 : vector<8x128xf32>
    %c240_i32 = arith.constant 240 : i32
    %314 = tpu.dynamic_rotate %138 by %c240_i32 dim 1 : vector<8x256xf32>, i32 -> vector<8x256xf32>
    %315 = vector.extract_strided_slice %314 {offsets = [0, 0], sizes = [8, 128], strides = [1, 1]} : vector<8x256xf32> to vector<8x128xf32>
    %316 = vector.broadcast %35 : vector<8x1xf32> to vector<8x128xf32>
    %317 = arith.mulf %316, %315 : vector<8x128xf32>
    %318 = arith.addf %307, %317 : vector<8x128xf32>
    %319 = vector.broadcast %77 : vector<8x1xf32> to vector<8x128xf32>
    %320 = arith.mulf %319, %315 : vector<8x128xf32>
    %321 = arith.addf %310, %320 : vector<8x128xf32>
    %322 = vector.broadcast %119 : vector<8x1xf32> to vector<8x128xf32>
    %323 = arith.mulf %322, %315 : vector<8x128xf32>
    %324 = arith.addf %313, %323 : vector<8x128xf32>
    %c239_i32 = arith.constant 239 : i32
    %325 = tpu.dynamic_rotate %138 by %c239_i32 dim 1 : vector<8x256xf32>, i32 -> vector<8x256xf32>
    %326 = vector.extract_strided_slice %325 {offsets = [0, 0], sizes = [8, 128], strides = [1, 1]} : vector<8x256xf32> to vector<8x128xf32>
    %327 = vector.broadcast %37 : vector<8x1xf32> to vector<8x128xf32>
    %328 = arith.mulf %327, %326 : vector<8x128xf32>
    %329 = arith.addf %318, %328 : vector<8x128xf32>
    %330 = vector.broadcast %79 : vector<8x1xf32> to vector<8x128xf32>
    %331 = arith.mulf %330, %326 : vector<8x128xf32>
    %332 = arith.addf %321, %331 : vector<8x128xf32>
    %333 = vector.broadcast %121 : vector<8x1xf32> to vector<8x128xf32>
    %334 = arith.mulf %333, %326 : vector<8x128xf32>
    %335 = arith.addf %324, %334 : vector<8x128xf32>
    %c238_i32 = arith.constant 238 : i32
    %336 = tpu.dynamic_rotate %138 by %c238_i32 dim 1 : vector<8x256xf32>, i32 -> vector<8x256xf32>
    %337 = vector.extract_strided_slice %336 {offsets = [0, 0], sizes = [8, 128], strides = [1, 1]} : vector<8x256xf32> to vector<8x128xf32>
    %338 = vector.broadcast %39 : vector<8x1xf32> to vector<8x128xf32>
    %339 = arith.mulf %338, %337 : vector<8x128xf32>
    %340 = arith.addf %329, %339 : vector<8x128xf32>
    %341 = vector.broadcast %81 : vector<8x1xf32> to vector<8x128xf32>
    %342 = arith.mulf %341, %337 : vector<8x128xf32>
    %343 = arith.addf %332, %342 : vector<8x128xf32>
    %344 = vector.broadcast %123 : vector<8x1xf32> to vector<8x128xf32>
    %345 = arith.mulf %344, %337 : vector<8x128xf32>
    %346 = arith.addf %335, %345 : vector<8x128xf32>
    %c237_i32 = arith.constant 237 : i32
    %347 = tpu.dynamic_rotate %138 by %c237_i32 dim 1 : vector<8x256xf32>, i32 -> vector<8x256xf32>
    %348 = vector.extract_strided_slice %347 {offsets = [0, 0], sizes = [8, 128], strides = [1, 1]} : vector<8x256xf32> to vector<8x128xf32>
    %349 = vector.broadcast %41 : vector<8x1xf32> to vector<8x128xf32>
    %350 = arith.mulf %349, %348 : vector<8x128xf32>
    %351 = arith.addf %340, %350 : vector<8x128xf32>
    %352 = vector.broadcast %83 : vector<8x1xf32> to vector<8x128xf32>
    %353 = arith.mulf %352, %348 : vector<8x128xf32>
    %354 = arith.addf %343, %353 : vector<8x128xf32>
    %355 = vector.broadcast %125 : vector<8x1xf32> to vector<8x128xf32>
    %356 = arith.mulf %355, %348 : vector<8x128xf32>
    %357 = arith.addf %346, %356 : vector<8x128xf32>
    %c236_i32 = arith.constant 236 : i32
    %358 = tpu.dynamic_rotate %138 by %c236_i32 dim 1 : vector<8x256xf32>, i32 -> vector<8x256xf32>
    %359 = vector.extract_strided_slice %358 {offsets = [0, 0], sizes = [8, 128], strides = [1, 1]} : vector<8x256xf32> to vector<8x128xf32>
    %360 = vector.broadcast %43 : vector<8x1xf32> to vector<8x128xf32>
    %361 = arith.mulf %360, %359 : vector<8x128xf32>
    %362 = arith.addf %351, %361 : vector<8x128xf32>
    %363 = vector.broadcast %85 : vector<8x1xf32> to vector<8x128xf32>
    %364 = arith.mulf %363, %359 : vector<8x128xf32>
    %365 = arith.addf %354, %364 : vector<8x128xf32>
    %366 = vector.broadcast %127 : vector<8x1xf32> to vector<8x128xf32>
    %367 = arith.mulf %366, %359 : vector<8x128xf32>
    %368 = arith.addf %357, %367 : vector<8x128xf32>
    %369 = arith.mulf %362, %249 : vector<8x128xf32>
    %370 = arith.mulf %365, %368 : vector<8x128xf32>
    %371 = arith.subf %369, %370 : vector<8x128xf32>
    %c0_6 = arith.constant 0 : index
    %372 = arith.index_cast %136 : i32 to index
    %373 = vector.load %arg4[%c0_6, %372] : memref<8x128xf32, #tpu.memory_space<vmem>>, vector<8x128xf32>
    tpu.vector_store %arg4[%c0_6, %372], %371 {strides = array<i32>} : memref<8x128xf32, #tpu.memory_space<vmem>>, vector<8x128xf32>,
    %c1_i32 = arith.constant 1 : i32
    return
  }
  func.func @transform_0(%arg0: i32) -> (i32, i32) {
    %c0_i32 = arith.constant 0 : i32
    %c0_i32_0 = arith.constant 0 : i32
    return %arg0, %c0_i32 : i32, i32
  }
  func.func @transform_1(%arg0: i32) -> (i32, i32, i32) {
    %c0_i32 = arith.constant 0 : i32
    %c0_i32_0 = arith.constant 0 : i32
    %c0_i32_1 = arith.constant 0 : i32
    return %c0_i32, %arg0, %c0_i32_0 : i32, i32, i32
  }
  func.func @transform_2(%arg0: i32) -> (i32, i32) {
    %c0_i32 = arith.constant 0 : i32
    %c0_i32_0 = arith.constant 0 : i32
    return %arg0, %c0_i32 : i32, i32
  }
  func.func @transform_3(%arg0: i32) -> (i32, i32) {
    %c0_i32 = arith.constant 0 : i32
    %c0_i32_0 = arith.constant 0 : i32
    return %arg0, %c0_i32 : i32, i32
  }
}

</mosaic_0001>

<llo_original>
// kernel: tpu_custom_call.1
$region0: #{tpu_custom_call.1}
  #allocation0 [shape = 'u32[]', space=smem, size = 0x4, offset = 0x4, fixed_abs, tag = 'smem constant byte address 0x4 - core index']
  #allocation1 [shape = 'u32[144,128]{1,0:T(1,128)}', space=vmem, size = 0x12000, scoped, tag = 'internal scratch']
  %s0 = inlined_call_operand.hbm [shape: f32[16,256], index: 0, kind: input, shape index: {}]
  %s1 = inlined_call_operand.hbm [shape: f32[3,16,21], index: 1, kind: input, shape index: {}]
  %s2 = inlined_call_operand.vmem [shape: f32[16,1], index: 2, kind: input, shape index: {}]
  %s3 = inlined_call_operand.hbm [shape: f32[16,128], index: 3, kind: output, shape index: {}]
  %s4 = sld [smem:[#allocation0]]
  $region53: #{tpu_custom_call.1} parent=0
    _
  %s6 = ssub.s32 1, %s4
  %s7 = scalar_select 0, %s6, %s4
  $region1: #{tpu_custom_call.1} parent=0
    #allocation2 [shape = 'u8[16384]{0}', space=vmem, size = 0x4000, scoped, tag = 'input window, operand 0']
    #allocation3 [shape = 's32[2]{0}', space=sflag, size = 0x8, scoped, tag = 'scoped memory for tpu_custom_call.1']
    #allocation4 [shape = 's32[2]{0}', space=sflag, size = 0x8, scoped, tag = 'scoped memory for tpu_custom_call.1']
    #allocation5 [shape = 'u8[24576]{0}', space=vmem, size = 0x6000, scoped, tag = 'input window, operand 1']
    #allocation6 [shape = 's32[2]{0}', space=sflag, size = 0x8, scoped, tag = 'scoped memory for tpu_custom_call.1']
    #allocation7 [shape = 'u8[8192]{0}', space=vmem, size = 0x2000, scoped, tag = 'output window, operand 0']
    %8 = vsyncpa [#allocation3], 0
    %s9 = scalar_lea.sflag [#allocation3], 1
    %10 = vsyncpa %s9, 0
    %11 = vsyncpa [#allocation6], 0
    %s12 = scalar_lea.sflag [#allocation6], 1
    %13 = vsyncpa %s12, 0
    %14 = vsyncpa [#allocation4], 0
    %s15 = scalar_lea.sflag [#allocation4], 1
    %16 = vsyncpa %s15, 0
    loop: start=0, step=1, limit=4
    $region2: #{tpu_custom_call.1} parent=1 // loop_pre_header
      _
    $region3: #{tpu_custom_call.1} parent=1 // loop_header
      %s18 = sphi 0, %s22
      %p19 = scmp.ge.s32.totalorder %s18, 4
      %s28 = sphi 0, %s30
      %s31 = sphi 0, %s28
      %s32 = sphi 0, %s31
      %s48 = sphi 0, %s32
      %s54 = sphi 0, %s56
      %s57 = sphi 0, %s54
      %s58 = sphi 0, %s57
      %s74 = sphi 0, %s58
      %s80 = sphi 0, %s82
      %s83 = sphi 0, %s80
      %s84 = sphi 0, %s83
      %s100 = sphi 0, %s84
      %s106 = sphi 0, %s108
      %s109 = sphi 0, %s106
      %s110 = sphi 0, %s109
      %s126 = sphi 0, %s110
    $region4: #{tpu_custom_call.1} parent=1 // loop_header_branch
      %21 = sbr.rel (%p19) target = $region8
    $region5: #{tpu_custom_call.1} parent=1 // loop_body
      %s23 = ssub.s32 %s18, 1
      %s24 = ssub.s32 %s18, 2
      %s25 = sadd.s32 %s18, 1
      %s26 = ssub.s32 %s18, %s25
      %p27 = scmp.eq.s32.totalorder %s26, 0
      %s29 = sadd.s32 %s28, 1
      %s30 = scalar_select %p27, %s28, %s29
      %p33 = pneg %p27
      %p34 = scmp.eq.s32.totalorder %s18, 1
      %p35 = por %p33, %p34
      %p36 = scmp.ne.s32.totalorder %s28, %s31
      %p37 = scmp.eq.s32.totalorder %s18, 0
      %p38 = por %p36, %p37
      %p39 = scmp.ne.s32.totalorder %s28, %s31
      %p40 = scmp.eq.s32.totalorder %s23, 1
      %p41 = por %p39, %p40
      %p42 = scmp.ne.s32.totalorder %s31, %s32
      %p43 = scmp.eq.s32.totalorder %s23, 0
      %p44 = por %p42, %p43
      %p45 = scmp.ne.s32.totalorder %s31, %s32
      %p46 = scmp.eq.s32.totalorder %s24, 1
      %p47 = por %p45, %p46
      %p49 = scmp.ne.s32.totalorder %s32, %s48
      %p50 = scmp.eq.s32.totalorder %s24, 0
      %p51 = por %p49, %p50
      %s52 = ssub.s32 %s18, %s25
      %p53 = scmp.eq.s32.totalorder %s52, 0
      %s55 = sadd.s32 %s54, 1
      %s56 = scalar_select %p53, %s54, %s55
      %p59 = pneg %p53
      %p60 = scmp.eq.s32.totalorder %s18, 1
      %p61 = por %p59, %p60
      %p62 = scmp.ne.s32.totalorder %s54, %s57
      %p63 = scmp.eq.s32.totalorder %s18, 0
      %p64 = por %p62, %p63
      %p65 = scmp.ne.s32.totalorder %s54, %s57
      %p66 = scmp.eq.s32.totalorder %s23, 1
      %p67 = por %p65, %p66
      %p68 = scmp.ne.s32.totalorder %s57, %s58
      %p69 = scmp.eq.s32.totalorder %s23, 0
      %p70 = por %p68, %p69
      %p71 = scmp.ne.s32.totalorder %s57, %s58
      %p72 = scmp.eq.s32.totalorder %s24, 1
      %p73 = por %p71, %p72
      %p75 = scmp.ne.s32.totalorder %s58, %s74
      %p76 = scmp.eq.s32.totalorder %s24, 0
      %p77 = por %p75, %p76
      %s78 = ssub.s32 %s18, %s25
      %p79 = scmp.eq.s32.totalorder %s78, 0
      %s81 = sadd.s32 %s80, 1
      %s82 = scalar_select %p79, %s80, %s81
      %p85 = pneg %p79
      %p86 = scmp.eq.s32.totalorder %s18, 1
      %p87 = por %p85, %p86
      %p88 = scmp.ne.s32.totalorder %s80, %s83
      %p89 = scmp.eq.s32.totalorder %s18, 0
      %p90 = por %p88, %p89
      %p91 = scmp.ne.s32.totalorder %s80, %s83
      %p92 = scmp.eq.s32.totalorder %s23, 1
      %p93 = por %p91, %p92
      %p94 = scmp.ne.s32.totalorder %s83, %s84
      %p95 = scmp.eq.s32.totalorder %s23, 0
      %p96 = por %p94, %p95
      %p97 = scmp.ne.s32.totalorder %s83, %s84
      %p98 = scmp.eq.s32.totalorder %s24, 1
      %p99 = por %p97, %p98
      %p101 = scmp.ne.s32.totalorder %s84, %s100
      %p102 = scmp.eq.s32.totalorder %s24, 0
      %p103 = por %p101, %p102
      %s104 = ssub.s32 %s18, %s25
      %p105 = scmp.eq.s32.totalorder %s104, 0
      %s107 = sadd.s32 %s106, 1
      %s108 = scalar_select %p105, %s106, %s107
      %p111 = pneg %p105
      %p112 = scmp.eq.s32.totalorder %s18, 1
      %p113 = por %p111, %p112
      %p114 = scmp.ne.s32.totalorder %s106, %s109
      %p115 = scmp.eq.s32.totalorder %s18, 0
      %p116 = por %p114, %p115
      %p117 = scmp.ne.s32.totalorder %s106, %s109
      %p118 = scmp.eq.s32.totalorder %s23, 1
      %p119 = por %p117, %p118
      %p120 = scmp.ne.s32.totalorder %s109, %s110
      %p121 = scmp.eq.s32.totalorder %s23, 0
      %p122 = por %p120, %p121
      %p123 = scmp.ne.s32.totalorder %s109, %s110
      %p124 = scmp.eq.s32.totalorder %s24, 1
      %p125 = por %p123, %p124
      %p127 = scmp.ne.s32.totalorder %s110, %s126
      %p128 = scmp.eq.s32.totalorder %s24, 0
      %p129 = por %p127, %p128
      %p130 = scmp.le.s32.totalorder 1, %s18
      %p131 = scmp.lt.s32.totalorder %s18, 3
      %p132 = pnand %p130, %p131
      %p133 = pneg %p132
      // Predicated region
      $region9: #{tpu_custom_call.1} parent=5 // pred_check
        _
      $region10: #{tpu_custom_call.1} parent=5 // pred_check_branch
        %135 = sbr.rel (%p132) target = $region12
      $region11: #{tpu_custom_call.1} parent=5 // pred_region
        %s136 = ssub.s32 %s18, 1
      $region12: #{tpu_custom_call.1} parent=5 // pred_fallthru
        _
      %p137 = scmp.lt.s32.totalorder %s18, 2
      // Predicated region
      $region13: #{tpu_custom_call.1} parent=5 // pred_check
        %p138 = pneg %p137
      $region14: #{tpu_custom_call.1} parent=5 // pred_check_branch
        %140 = sbr.rel (%p138) target = $region16
      $region15: #{tpu_custom_call.1} parent=5 // pred_region
        // Predicated region
        $region17: #{tpu_custom_call.1} parent=15 // pred_check
          %p141 = pneg %p38
        $region18: #{tpu_custom_call.1} parent=15 // pred_check_branch
          %143 = sbr.rel (%p141) target = $region20
        $region19: #{tpu_custom_call.1} parent=15 // pred_region
          %s144 = sand.u32 %s28, 1
          %s145 = scalar_lea.sflag [#allocation3], %s144
          %s146 = sand.u32 %s28, 1
          %s147 = smul.addr %s146, 16
          %s148 = scalar_lea.vmem [#allocation2], %s147
          %s150 = ssub.s32 256, 256
          %151 = vsyncadd %s145, %s150
          %s152 = smul.addr %s18, 2
          %s153 = smul.addr %s152, 128
          %s154 = scalar_lea.hbm %s0, %s153
          %s156 = sshll.u32 %s148, 4
          %s157 = int_to_ptr.vmem [resolvable:$true] %s156
          %159 = dma.hbm_to_vmem [thread:$0]  %s154, 256, %s157, %s145
        $region20: #{tpu_custom_call.1} parent=15 // pred_fallthru
          _
        // Predicated region
        $region21: #{tpu_custom_call.1} parent=15 // pred_check
          %p160 = pneg %p64
        $region22: #{tpu_custom_call.1} parent=15 // pred_check_branch
          %162 = sbr.rel (%p160) target = $region24
        $region23: #{tpu_custom_call.1} parent=15 // pred_region
          %s163 = sand.u32 %s54, 1
          %s164 = scalar_lea.sflag [#allocation6], %s163
          %s165 = sand.u32 %s54, 1
          %s166 = smul.addr %s165, 24
          %s167 = scalar_lea.vmem [#allocation5], %s166
          %s169 = ssub.s32 384, 384
          %170 = vsyncadd %s164, %s169
          %s171 = smul.addr %s18, 128
          %s172 = scalar_lea.hbm %s1, %s171
          %s173 = sshll.u32 %s167, 4
          %s174 = int_to_ptr.vmem [resolvable:$true] %s173
          %179 = dma.hbm_to_vmem [thread:$0]  %s172, 384, %s174, %s164, 256, 128, 8
        $region24: #{tpu_custom_call.1} parent=15 // pred_fallthru
          _
        // Predicated region
        $region25: #{tpu_custom_call.1} parent=15 // pred_check
          %p180 = pneg %p90
        $region26: #{tpu_custom_call.1} parent=15 // pred_check_branch
          %182 = sbr.rel (%p180) target = $region28
        $region27: #{tpu_custom_call.1} parent=15 // pred_region
          %p183 = scmp.lt.s32.totalorder %s18, 1
          %s184 = scalar_select %p183, %s18, 1
          %s185 = smul.addr %s184, 8
          %s186 = scalar_lea.vmem %s2, %s185
        $region28: #{tpu_custom_call.1} parent=15 // pred_fallthru
          _
      $region16: #{tpu_custom_call.1} parent=5 // pred_fallthru
        _
      %p187 = scmp.le.s32.totalorder 1, %s18
      %p188 = scmp.lt.s32.totalorder %s18, 3
      %p189 = pnand %p187, %p188
      %p190 = pneg %p189
      // Predicated region
      $region29: #{tpu_custom_call.1} parent=5 // pred_check
        _
      $region30: #{tpu_custom_call.1} parent=5 // pred_check_branch
        %192 = sbr.rel (%p189) target = $region32
      $region31: #{tpu_custom_call.1} parent=5 // pred_region
        %s193 = ssub.s32 %s18, 1
        %s194 = sand.u32 %s31, 1
        %s195 = scalar_lea.sflag [#allocation3], %s194
        %s196 = sand.u32 %s31, 1
        %s197 = smul.addr %s196, 16
        %s198 = scalar_lea.vmem [#allocation2], %s197
        // Predicated region
        $region33: #{tpu_custom_call.1} parent=31 // pred_check
          %p199 = pneg %p44
        $region34: #{tpu_custom_call.1} parent=31 // pred_check_branch
          %201 = sbr.rel (%p199) target = $region36
        $region35: #{tpu_custom_call.1} parent=31 // pred_region
          %202 = dma.done %s195, 256
        $region36: #{tpu_custom_call.1} parent=31 // pred_fallthru
          _
        %s203 = sand.u32 %s57, 1
        %s204 = scalar_lea.sflag [#allocation6], %s203
        %s205 = sand.u32 %s57, 1
        %s206 = smul.addr %s205, 24
        %s207 = scalar_lea.vmem [#allocation5], %s206
        // Predicated region
        $region37: #{tpu_custom_call.1} parent=31 // pred_check
          %p208 = pneg %p70
        $region38: #{tpu_custom_call.1} parent=31 // pred_check_branch
          %210 = sbr.rel (%p208) target = $region40
        $region39: #{tpu_custom_call.1} parent=31 // pred_region
          %211 = dma.done %s204, 384
        $region40: #{tpu_custom_call.1} parent=31 // pred_fallthru
          _
        %s212 = sand.u32 %s31, 1
        %s213 = scalar_lea.sflag [#allocation3], %s212
        %s214 = sand.u32 %s31, 1
        %s215 = smul.addr %s214, 16
        %s216 = scalar_lea.vmem [#allocation2], %s215
        %p217 = pneg %p44
        %p218 = pneg %p41
        %s219 = sand.u32 %s57, 1
        %s220 = scalar_lea.sflag [#allocation6], %s219
        %s221 = sand.u32 %s57, 1
        %s222 = smul.addr %s221, 24
        %s223 = scalar_lea.vmem [#allocation5], %s222
        %p224 = pneg %p70
        %p225 = pneg %p67
        %p226 = scmp.lt.s32.totalorder %s23, 1
        %s227 = scalar_select %p226, %s23, 1
        %s228 = smul.addr %s227, 8
        %s229 = scalar_lea.vmem %s2, %s228
        %p230 = pneg %p96
        %p231 = pneg %p93
        %p232 = pneg %p122
        %p233 = pneg %p119
        %s234 = sand.u32 %s109, 1
        %s235 = scalar_lea.sflag [#allocation4], %s234
        %s236 = sand.u32 %s109, 1
        %s237 = smul.addr %s236, 8
        %s238 = scalar_lea.vmem [#allocation7], %s237
        %p239 = scmp.lt.s32.totalorder %s23, 1
        %s240 = scalar_select %p239, %s23, 1
        %s241 = smul.addr %s240, 8
        %s242 = scalar_lea.vmem %s2, %s241
        %v243 = vld [vmem:[%s207] sm:$0xff]
        %v244 = vld [vmem:[%s207 + $0x8] sm:$0xff]
        %v245 = vld [vmem:[%s207 + $0x10] sm:$0xff]
        %v246 = vld [vmem:[%s242] sm:$0xff]
        %v247 = vadd.f32 %v246, 1.0
        %249 = vset.pattern.permute.xlu0 0
        %250 = vperm.xlu0 %249, %v247
        %v251 = vpop.permute.xlu0 %250
        %254 = vset.pattern.permute.xlu0 0
        %255 = vperm.xlu0 %254, %v246
        %v256 = vpop.permute.xlu0 %255
        %v258 = vld [vmem:[%s198] sm:$0xff]
        %v259 = vld [vmem:[%s198 + $0x8] sm:$0xff]
        %261 = vset.pattern.permute.xlu0 0
        %262 = vperm.xlu0 %261, %v243
        %v263 = vpop.permute.xlu0 %262
        %v265 = vmul.f32 %v263, %v258
        %v266 = vadd.f32 %v251, %v265
        %268 = vset.pattern.permute.xlu0 0
        %269 = vperm.xlu0 %268, %v244
        %v270 = vpop.permute.xlu0 %269
        %v272 = vmul.f32 %v270, %v258
        %v273 = vadd.f32 %v256, %v272
        %275 = vset.pattern.permute.xlu0 0
        %276 = vperm.xlu0 %275, %v245
        %v277 = vpop.permute.xlu0 %276
        %v279 = vmul.f32 %v277, %v258
        %v280 = vadd.f32 %v256, %v279
        %281 = vrot.lane.b32.xlu0 %v258, 127
        %v282 = vpop.permute.xlu0 %281
        %283 = vrot.lane.b32.xlu0 %v259, 127
        %v284 = vpop.permute.xlu0 %283
        %v285 = vlaneseq
        %v286 = vand.u32 %v285, 127
        %vm287 = vcmp.lt.s32.totalorder %v286, 127
        %v288 = vsel %vm287, %v282, %v284
        %289 = vset.pattern.permute.xlu0 1
        %290 = vperm.xlu0 %289, %v243
        %v291 = vpop.permute.xlu0 %290
        %v293 = vmul.f32 %v291, %v288
        %v294 = vadd.f32 %v266, %v293
        %295 = vset.pattern.permute.xlu0 1
        %296 = vperm.xlu0 %295, %v244
        %v297 = vpop.permute.xlu0 %296
        %v299 = vmul.f32 %v297, %v288
        %v300 = vadd.f32 %v273, %v299
        %301 = vset.pattern.permute.xlu0 1
        %302 = vperm.xlu0 %301, %v245
        %v303 = vpop.permute.xlu0 %302
        %v305 = vmul.f32 %v303, %v288
        %v306 = vadd.f32 %v280, %v305
        %307 = vrot.lane.b32.xlu0 %v258, 126
        %v308 = vpop.permute.xlu0 %307
        %309 = vrot.lane.b32.xlu0 %v259, 126
        %v310 = vpop.permute.xlu0 %309
        %vm311 = vcmp.lt.s32.totalorder %v286, 126
        %v312 = vsel %vm311, %v308, %v310
        %313 = vset.pattern.permute.xlu0 2
        %314 = vperm.xlu0 %313, %v243
        %v315 = vpop.permute.xlu0 %314
        %v317 = vmul.f32 %v315, %v312
        %v318 = vadd.f32 %v294, %v317
        %319 = vset.pattern.permute.xlu0 2
        %320 = vperm.xlu0 %319, %v244
        %v321 = vpop.permute.xlu0 %320
        %v323 = vmul.f32 %v321, %v312
        %v324 = vadd.f32 %v300, %v323
        %325 = vset.pattern.permute.xlu0 2
        %326 = vperm.xlu0 %325, %v245
        %v327 = vpop.permute.xlu0 %326
        %v329 = vmul.f32 %v327, %v312
        %v330 = vadd.f32 %v306, %v329
        %331 = vrot.lane.b32.xlu0 %v258, 125
        %v332 = vpop.permute.xlu0 %331
        %333 = vrot.lane.b32.xlu0 %v259, 125
        %v334 = vpop.permute.xlu0 %333
        %vm335 = vcmp.lt.s32.totalorder %v286, 125
        %v336 = vsel %vm335, %v332, %v334
        %337 = vset.pattern.permute.xlu0 3
        %338 = vperm.xlu0 %337, %v243
        %v339 = vpop.permute.xlu0 %338
        %v341 = vmul.f32 %v339, %v336
        %v342 = vadd.f32 %v318, %v341
        %343 = vset.pattern.permute.xlu0 3
        %344 = vperm.xlu0 %343, %v244
        %v345 = vpop.permute.xlu0 %344
        %v347 = vmul.f32 %v345, %v336
        %v348 = vadd.f32 %v324, %v347
        %349 = vset.pattern.permute.xlu0 3
        %350 = vperm.xlu0 %349, %v245
        %v351 = vpop.permute.xlu0 %350
        %v353 = vmul.f32 %v351, %v336
        %v354 = vadd.f32 %v330, %v353
        %355 = vrot.lane.b32.xlu0 %v258, 124
        %v356 = vpop.permute.xlu0 %355
        %357 = vrot.lane.b32.xlu0 %v259, 124
        %v358 = vpop.permute.xlu0 %357
        %vm359 = vcmp.lt.s32.totalorder %v286, 124
        %v360 = vsel %vm359, %v356, %v358
        %361 = vset.pattern.permute.xlu0 4
        %362 = vperm.xlu0 %361, %v243
        %v363 = vpop.permute.xlu0 %362
        %v365 = vmul.f32 %v363, %v360
        %v366 = vadd.f32 %v342, %v365
        %367 = vset.pattern.permute.xlu0 4
        %368 = vperm.xlu0 %367, %v244
        %v369 = vpop.permute.xlu0 %368
        %v371 = vmul.f32 %v369, %v360
        %v372 = vadd.f32 %v348, %v371
        %373 = vset.pattern.permute.xlu0 4
        %374 = vperm.xlu0 %373, %v245
        %v375 = vpop.permute.xlu0 %374
        %v377 = vmul.f32 %v375, %v360
        %v378 = vadd.f32 %v354, %v377
        %379 = vrot.lane.b32.xlu0 %v258, 123
        %v380 = vpop.permute.xlu0 %379
        %381 = vrot.lane.b32.xlu0 %v259, 123
        %v382 = vpop.permute.xlu0 %381
        %vm383 = vcmp.lt.s32.totalorder %v286, 123
        %v384 = vsel %vm383, %v380, %v382
        %385 = vset.pattern.permute.xlu0 5
        %386 = vperm.xlu0 %385, %v243
        %v387 = vpop.permute.xlu0 %386
        %v389 = vmul.f32 %v387, %v384
        %v390 = vadd.f32 %v366, %v389
        %391 = vset.pattern.permute.xlu0 5
        %392 = vperm.xlu0 %391, %v244
        %v393 = vpop.permute.xlu0 %392
        %v395 = vmul.f32 %v393, %v384
        %v396 = vadd.f32 %v372, %v395
        %397 = vset.pattern.permute.xlu0 5
        %398 = vperm.xlu0 %397, %v245
        %v399 = vpop.permute.xlu0 %398
        %v401 = vmul.f32 %v399, %v384
        %v402 = vadd.f32 %v378, %v401
        %403 = vrot.lane.b32.xlu0 %v258, 122
        %v404 = vpop.permute.xlu0 %403
        %405 = vrot.lane.b32.xlu0 %v259, 122
        %v406 = vpop.permute.xlu0 %405
        %vm407 = vcmp.lt.s32.totalorder %v286, 122
        %v408 = vsel %vm407, %v404, %v406
        %409 = vset.pattern.permute.xlu0 6
        %410 = vperm.xlu0 %409, %v243
        %v411 = vpop.permute.xlu0 %410
        %v413 = vmul.f32 %v411, %v408
        %v414 = vadd.f32 %v390, %v413
        %415 = vset.pattern.permute.xlu0 6
        %416 = vperm.xlu0 %415, %v244
        %v417 = vpop.permute.xlu0 %416
        %v419 = vmul.f32 %v417, %v408
        %v420 = vadd.f32 %v396, %v419
        %421 = vset.pattern.permute.xlu0 6
        %422 = vperm.xlu0 %421, %v245
        %v423 = vpop.permute.xlu0 %422
        %v425 = vmul.f32 %v423, %v408
        %v426 = vadd.f32 %v402, %v425
        %427 = vrot.lane.b32.xlu0 %v258, 121
        %v428 = vpop.permute.xlu0 %427
        %429 = vrot.lane.b32.xlu0 %v259, 121
        %v430 = vpop.permute.xlu0 %429
        %vm431 = vcmp.lt.s32.totalorder %v286, 121
        %v432 = vsel %vm431, %v428, %v430
        %433 = vset.pattern.permute.xlu0 7
        %434 = vperm.xlu0 %433, %v243
        %v435 = vpop.permute.xlu0 %434
        %v437 = vmul.f32 %v435, %v432
        %v438 = vadd.f32 %v414, %v437
        %439 = vset.pattern.permute.xlu0 7
        %440 = vperm.xlu0 %439, %v244
        %v441 = vpop.permute.xlu0 %440
        %v443 = vmul.f32 %v441, %v432
        %v444 = vadd.f32 %v420, %v443
        %445 = vset.pattern.permute.xlu0 7
        %446 = vperm.xlu0 %445, %v245
        %v447 = vpop.permute.xlu0 %446
        %v449 = vmul.f32 %v447, %v432
        %v450 = vadd.f32 %v426, %v449
        %451 = vrot.lane.b32.xlu0 %v258, 120
        %v452 = vpop.permute.xlu0 %451
        %453 = vrot.lane.b32.xlu0 %v259, 120
        %v454 = vpop.permute.xlu0 %453
        %vm455 = vcmp.lt.s32.totalorder %v286, 120
        %v456 = vsel %vm455, %v452, %v454
        %457 = vset.pattern.permute.xlu0 8
        %458 = vperm.xlu0 %457, %v243
        %v459 = vpop.permute.xlu0 %458
        %v461 = vmul.f32 %v459, %v456
        %v462 = vadd.f32 %v438, %v461
        %463 = vset.pattern.permute.xlu0 8
        %464 = vperm.xlu0 %463, %v244
        %v465 = vpop.permute.xlu0 %464
        %v467 = vmul.f32 %v465, %v456
        %v468 = vadd.f32 %v444, %v467
        %469 = vset.pattern.permute.xlu0 8
        %470 = vperm.xlu0 %469, %v245
        %v471 = vpop.permute.xlu0 %470
        %v473 = vmul.f32 %v471, %v456
        %v474 = vadd.f32 %v450, %v473
        %475 = vrot.lane.b32.xlu0 %v258, 119
        %v476 = vpop.permute.xlu0 %475
        %477 = vrot.lane.b32.xlu0 %v259, 119
        %v478 = vpop.permute.xlu0 %477
        %vm479 = vcmp.lt.s32.totalorder %v286, 119
        %v480 = vsel %vm479, %v476, %v478
        %481 = vset.pattern.permute.xlu0 9
        %482 = vperm.xlu0 %481, %v243
        %v483 = vpop.permute.xlu0 %482
        %v485 = vmul.f32 %v483, %v480
        %v486 = vadd.f32 %v462, %v485
        %487 = vset.pattern.permute.xlu0 9
        %488 = vperm.xlu0 %487, %v244
        %v489 = vpop.permute.xlu0 %488
        %v491 = vmul.f32 %v489, %v480
        %v492 = vadd.f32 %v468, %v491
        %493 = vset.pattern.permute.xlu0 9
        %494 = vperm.xlu0 %493, %v245
        %v495 = vpop.permute.xlu0 %494
        %v497 = vmul.f32 %v495, %v480
        %v498 = vadd.f32 %v474, %v497
        %499 = vrot.lane.b32.xlu0 %v258, 118
        %v500 = vpop.permute.xlu0 %499
        %501 = vrot.lane.b32.xlu0 %v259, 118
        %v502 = vpop.permute.xlu0 %501
        %vm503 = vcmp.lt.s32.totalorder %v286, 118
        %v504 = vsel %vm503, %v500, %v502
        %505 = vset.pattern.permute.xlu0 10
        %506 = vperm.xlu0 %505, %v243
        %v507 = vpop.permute.xlu0 %506
        %v509 = vmul.f32 %v507, %v504
        %v510 = vadd.f32 %v486, %v509
        %511 = vset.pattern.permute.xlu0 10
        %512 = vperm.xlu0 %511, %v244
        %v513 = vpop.permute.xlu0 %512
        %v515 = vmul.f32 %v513, %v504
        %v516 = vadd.f32 %v492, %v515
        %517 = vset.pattern.permute.xlu0 10
        %518 = vperm.xlu0 %517, %v245
        %v519 = vpop.permute.xlu0 %518
        %v521 = vmul.f32 %v519, %v504
        %v522 = vadd.f32 %v498, %v521
        %523 = vrot.lane.b32.xlu0 %v258, 117
        %v524 = vpop.permute.xlu0 %523
        %525 = vrot.lane.b32.xlu0 %v259, 117
        %v526 = vpop.permute.xlu0 %525
        %vm527 = vcmp.lt.s32.totalorder %v286, 117
        %v528 = vsel %vm527, %v524, %v526
        %529 = vset.pattern.permute.xlu0 11
        %530 = vperm.xlu0 %529, %v243
        %v531 = vpop.permute.xlu0 %530
        %v533 = vmul.f32 %v531, %v528
        %v534 = vadd.f32 %v510, %v533
        %535 = vset.pattern.permute.xlu0 11
        %536 = vperm.xlu0 %535, %v244
        %v537 = vpop.permute.xlu0 %536
        %v539 = vmul.f32 %v537, %v528
        %v540 = vadd.f32 %v516, %v539
        %541 = vset.pattern.permute.xlu0 11
        %542 = vperm.xlu0 %541, %v245
        %v543 = vpop.permute.xlu0 %542
        %v545 = vmul.f32 %v543, %v528
        %v546 = vadd.f32 %v522, %v545
        %547 = vrot.lane.b32.xlu0 %v258, 116
        %v548 = vpop.permute.xlu0 %547
        %549 = vrot.lane.b32.xlu0 %v259, 116
        %v550 = vpop.permute.xlu0 %549
        %vm551 = vcmp.lt.s32.totalorder %v286, 116
        %v552 = vsel %vm551, %v548, %v550
        %553 = vset.pattern.permute.xlu0 12
        %554 = vperm.xlu0 %553, %v243
        %v555 = vpop.permute.xlu0 %554
        %v557 = vmul.f32 %v555, %v552
        %v558 = vadd.f32 %v534, %v557
        %559 = vset.pattern.permute.xlu0 12
        %560 = vperm.xlu0 %559, %v244
        %v561 = vpop.permute.xlu0 %560
        %v563 = vmul.f32 %v561, %v552
        %v564 = vadd.f32 %v540, %v563
        %565 = vset.pattern.permute.xlu0 12
        %566 = vperm.xlu0 %565, %v245
        %v567 = vpop.permute.xlu0 %566
        %v569 = vmul.f32 %v567, %v552
        %v570 = vadd.f32 %v546, %v569
        %571 = vrot.lane.b32.xlu0 %v258, 115
        %v572 = vpop.permute.xlu0 %571
        %573 = vrot.lane.b32.xlu0 %v259, 115
        %v574 = vpop.permute.xlu0 %573
        %vm575 = vcmp.lt.s32.totalorder %v286, 115
        %v576 = vsel %vm575, %v572, %v574
        %577 = vset.pattern.permute.xlu0 13
        %578 = vperm.xlu0 %577, %v243
        %v579 = vpop.permute.xlu0 %578
        %v581 = vmul.f32 %v579, %v576
        %v582 = vadd.f32 %v558, %v581
        %583 = vset.pattern.permute.xlu0 13
        %584 = vperm.xlu0 %583, %v244
        %v585 = vpop.permute.xlu0 %584
        %v587 = vmul.f32 %v585, %v576
        %v588 = vadd.f32 %v564, %v587
        %589 = vset.pattern.permute.xlu0 13
        %590 = vperm.xlu0 %589, %v245
        %v591 = vpop.permute.xlu0 %590
        %v593 = vmul.f32 %v591, %v576
        %v594 = vadd.f32 %v570, %v593
        %595 = vrot.lane.b32.xlu0 %v258, 114
        %v596 = vpop.permute.xlu0 %595
        %597 = vrot.lane.b32.xlu0 %v259, 114
        %v598 = vpop.permute.xlu0 %597
        %vm599 = vcmp.lt.s32.totalorder %v286, 114
        %v600 = vsel %vm599, %v596, %v598
        %601 = vset.pattern.permute.xlu0 14
        %602 = vperm.xlu0 %601, %v243
        %v603 = vpop.permute.xlu0 %602
        %v605 = vmul.f32 %v603, %v600
        %v606 = vadd.f32 %v582, %v605
        %607 = vset.pattern.permute.xlu0 14
        %608 = vperm.xlu0 %607, %v244
        %v609 = vpop.permute.xlu0 %608
        %v611 = vmul.f32 %v609, %v600
        %v612 = vadd.f32 %v588, %v611
        %613 = vset.pattern.permute.xlu0 14
        %614 = vperm.xlu0 %613, %v245
        %v615 = vpop.permute.xlu0 %614
        %v617 = vmul.f32 %v615, %v600
        %v618 = vadd.f32 %v594, %v617
        %619 = vrot.lane.b32.xlu0 %v258, 113
        %v620 = vpop.permute.xlu0 %619
        %621 = vrot.lane.b32.xlu0 %v259, 113
        %v622 = vpop.permute.xlu0 %621
        %vm623 = vcmp.lt.s32.totalorder %v286, 113
        %v624 = vsel %vm623, %v620, %v622
        %625 = vset.pattern.permute.xlu0 15
        %626 = vperm.xlu0 %625, %v243
        %v627 = vpop.permute.xlu0 %626
        %v629 = vmul.f32 %v627, %v624
        %v630 = vadd.f32 %v606, %v629
        %631 = vset.pattern.permute.xlu0 15
        %632 = vperm.xlu0 %631, %v244
        %v633 = vpop.permute.xlu0 %632
        %v635 = vmul.f32 %v633, %v624
        %v636 = vadd.f32 %v612, %v635
        %637 = vset.pattern.permute.xlu0 15
        %638 = vperm.xlu0 %637, %v245
        %v639 = vpop.permute.xlu0 %638
        %v641 = vmul.f32 %v639, %v624
        %v642 = vadd.f32 %v618, %v641
        %643 = vrot.lane.b32.xlu0 %v258, 112
        %v644 = vpop.permute.xlu0 %643
        %645 = vrot.lane.b32.xlu0 %v259, 112
        %v646 = vpop.permute.xlu0 %645
        %vm647 = vcmp.lt.s32.totalorder %v286, 112
        %v648 = vsel %vm647, %v644, %v646
        %649 = vset.pattern.permute.xlu0 16
        %650 = vperm.xlu0 %649, %v243
        %v651 = vpop.permute.xlu0 %650
        %v653 = vmul.f32 %v651, %v648
        %v654 = vadd.f32 %v630, %v653
        %655 = vset.pattern.permute.xlu0 16
        %656 = vperm.xlu0 %655, %v244
        %v657 = vpop.permute.xlu0 %656
        %v659 = vmul.f32 %v657, %v648
        %v660 = vadd.f32 %v636, %v659
        %661 = vset.pattern.permute.xlu0 16
        %662 = vperm.xlu0 %661, %v245
        %v663 = vpop.permute.xlu0 %662
        %v665 = vmul.f32 %v663, %v648
        %v666 = vadd.f32 %v642, %v665
        %667 = vrot.lane.b32.xlu0 %v258, 111
        %v668 = vpop.permute.xlu0 %667
        %669 = vrot.lane.b32.xlu0 %v259, 111
        %v670 = vpop.permute.xlu0 %669
        %vm671 = vcmp.lt.s32.totalorder %v286, 111
        %v672 = vsel %vm671, %v668, %v670
        %673 = vset.pattern.permute.xlu0 17
        %674 = vperm.xlu0 %673, %v243
        %v675 = vpop.permute.xlu0 %674
        %v677 = vmul.f32 %v675, %v672
        %v678 = vadd.f32 %v654, %v677
        %679 = vset.pattern.permute.xlu0 17
        %680 = vperm.xlu0 %679, %v244
        %v681 = vpop.permute.xlu0 %680
        %v683 = vmul.f32 %v681, %v672
        %v684 = vadd.f32 %v660, %v683
        %685 = vset.pattern.permute.xlu0 17
        %686 = vperm.xlu0 %685, %v245
        %v687 = vpop.permute.xlu0 %686
        %v689 = vmul.f32 %v687, %v672
        %v690 = vadd.f32 %v666, %v689
        %691 = vrot.lane.b32.xlu0 %v258, 110
        %v692 = vpop.permute.xlu0 %691
        %693 = vrot.lane.b32.xlu0 %v259, 110
        %v694 = vpop.permute.xlu0 %693
        %vm695 = vcmp.lt.s32.totalorder %v286, 110
        %v696 = vsel %vm695, %v692, %v694
        %697 = vset.pattern.permute.xlu0 18
        %698 = vperm.xlu0 %697, %v243
        %v699 = vpop.permute.xlu0 %698
        %v701 = vmul.f32 %v699, %v696
        %v702 = vadd.f32 %v678, %v701
        %703 = vset.pattern.permute.xlu0 18
        %704 = vperm.xlu0 %703, %v244
        %v705 = vpop.permute.xlu0 %704
        %v707 = vmul.f32 %v705, %v696
        %v708 = vadd.f32 %v684, %v707
        %709 = vset.pattern.permute.xlu0 18
        %710 = vperm.xlu0 %709, %v245
        %v711 = vpop.permute.xlu0 %710
        %v713 = vmul.f32 %v711, %v696
        %v714 = vadd.f32 %v690, %v713
        %715 = vrot.lane.b32.xlu0 %v258, 109
        %v716 = vpop.permute.xlu0 %715
        %717 = vrot.lane.b32.xlu0 %v259, 109
        %v718 = vpop.permute.xlu0 %717
        %vm719 = vcmp.lt.s32.totalorder %v286, 109
        %v720 = vsel %vm719, %v716, %v718
        %721 = vset.pattern.permute.xlu0 19
        %722 = vperm.xlu0 %721, %v243
        %v723 = vpop.permute.xlu0 %722
        %v725 = vmul.f32 %v723, %v720
        %v726 = vadd.f32 %v702, %v725
        %727 = vset.pattern.permute.xlu0 19
        %728 = vperm.xlu0 %727, %v244
        %v729 = vpop.permute.xlu0 %728
        %v731 = vmul.f32 %v729, %v720
        %v732 = vadd.f32 %v708, %v731
        %733 = vset.pattern.permute.xlu0 19
        %734 = vperm.xlu0 %733, %v245
        %v735 = vpop.permute.xlu0 %734
        %v737 = vmul.f32 %v735, %v720
        %v738 = vadd.f32 %v714, %v737
        %739 = vrot.lane.b32.xlu0 %v258, 108
        %v740 = vpop.permute.xlu0 %739
        %741 = vrot.lane.b32.xlu0 %v259, 108
        %v742 = vpop.permute.xlu0 %741
        %vm743 = vcmp.lt.s32.totalorder %v286, 108
        %v744 = vsel %vm743, %v740, %v742
        %745 = vset.pattern.permute.xlu0 20
        %746 = vperm.xlu0 %745, %v243
        %v747 = vpop.permute.xlu0 %746
        %v749 = vmul.f32 %v747, %v744
        %v750 = vadd.f32 %v726, %v749
        %751 = vset.pattern.permute.xlu0 20
        %752 = vperm.xlu0 %751, %v244
        %v753 = vpop.permute.xlu0 %752
        %v755 = vmul.f32 %v753, %v744
        %v756 = vadd.f32 %v732, %v755
        %757 = vset.pattern.permute.xlu0 20
        %758 = vperm.xlu0 %757, %v245
        %v759 = vpop.permute.xlu0 %758
        %v761 = vmul.f32 %v759, %v744
        %v762 = vadd.f32 %v738, %v761
        %v763 = vmul.f32 %v750, %v504
        %v764 = vmul.f32 %v756, %v762
        %v765 = vsub.f32 %v763, %v764
        %766 = vst [vmem:[%s238] sm:$0xff] %v765
        %s767 = sand.u32 %s109, 1
        %s768 = scalar_lea.sflag [#allocation4], %s767
        %s769 = sand.u32 %s109, 1
        %s770 = smul.addr %s769, 8
        %s771 = scalar_lea.vmem [#allocation7], %s770
        // Predicated region
        $region41: #{tpu_custom_call.1} parent=31 // pred_check
          %p772 = pneg %p119
        $region42: #{tpu_custom_call.1} parent=31 // pred_check_branch
          %774 = sbr.rel (%p772) target = $region44
        $region43: #{tpu_custom_call.1} parent=31 // pred_region
          %s776 = ssub.s32 128, 128
          %777 = vsyncadd %s768, %s776
          %s778 = smul.addr %s23, 128
          %s779 = scalar_lea.hbm %s3, %s778
          %s781 = sshll.u32 %s771, 4
          %s782 = int_to_ptr.vmem [resolvable:$true] %s781
          %784 = dma.vmem_to_hbm [thread:$0]  %s782, 128, %s779, %s768
        $region44: #{tpu_custom_call.1} parent=31 // pred_fallthru
          _
      $region32: #{tpu_custom_call.1} parent=5 // pred_fallthru
        _
      %p785 = scmp.le.s32.totalorder 2, %s18
      // Predicated region
      $region45: #{tpu_custom_call.1} parent=5 // pred_check
        %p786 = pneg %p785
      $region46: #{tpu_custom_call.1} parent=5 // pred_check_branch
        %788 = sbr.rel (%p786) target = $region48
      $region47: #{tpu_custom_call.1} parent=5 // pred_region
        %s789 = ssub.s32 %s18, 2
        // Predicated region
        $region49: #{tpu_custom_call.1} parent=47 // pred_check
          %p790 = pneg %p125
        $region50: #{tpu_custom_call.1} parent=47 // pred_check_branch
          %792 = sbr.rel (%p790) target = $region52
        $region51: #{tpu_custom_call.1} parent=47 // pred_region
          %s793 = sand.u32 %s110, 1
          %s794 = scalar_lea.sflag [#allocation4], %s793
          %s795 = sand.u32 %s110, 1
          %s796 = smul.addr %s795, 8
          %s797 = scalar_lea.vmem [#allocation7], %s796
          %798 = dma.done %s794, 128
        $region52: #{tpu_custom_call.1} parent=47 // pred_fallthru
          _
      $region48: #{tpu_custom_call.1} parent=5 // pred_fallthru
        _
    $region6: #{tpu_custom_call.1} parent=1 // loop_footer
      %s22 = sadd.s32 1, %s18
    $region7: #{tpu_custom_call.1} parent=1 // loop_footer_branch
      %17 = sbr.rel target = $region3
    $region8: #{tpu_custom_call.1} parent=1 // loop_exit
      _
    %799 = vsyncpa [#allocation3], 1
    %s800 = scalar_lea.sflag [#allocation3], 1
    %801 = vsyncpa %s800, 1
    %802 = vsyncpa [#allocation6], 1
    %s803 = scalar_lea.sflag [#allocation6], 1
    %804 = vsyncpa %s803, 1
    %805 = vsyncpa [#allocation4], 1
    %s806 = scalar_lea.sflag [#allocation4], 1
    %807 = vsyncpa %s806, 1

</llo_original>
